<compile_context>
chip_gen: v7x
topology: tpu7x:2x2x1
jax: 0.10.0
libtpu: 0.0.40
codegen_flags: <defaults>
</compile_context>

<pallas_src>
import functools
import math

import jax
import jax.numpy as jnp
from jax.experimental import pallas as pl
from jax.experimental.pallas import tpu as pltpu


_LANE = 128                          # vreg lane width
_MAX_LANES = 4096                    # cap on lane-dense last dim (multiple of 128)
_TARGET_TILE_BYTES = 2 * 1024 * 1024  # ~2 MiB/tile -> ~8 MiB double-buffered in+out
_VMEM_LIMIT_BYTES = 32 * 1024 * 1024


def _round_up(x, m):
    return ((x + m - 1) // m) * m


def _chomp1d_copy_kernel(x_ref, o_ref):
    # Identity: x.contiguous() just materializes the same values.
    o_ref[...] = x_ref[...]


@functools.partial(jax.jit, static_argnames=("chomp_size",))
def chomp1d(x, chomp_size=0):
    """Pallas implementation of Chomp1d.forward (identity / .contiguous()).

    `chomp_size` is stored by the nn.Module but unused by forward(); kept only
    for API parity.
    """
    del chomp_size  # forward() does not use it

    orig_shape = x.shape
    total = math.prod(orig_shape)
    if total == 0:
        return x

    itemsize = jnp.dtype(x.dtype).itemsize
    # Sublane packing granularity: 8 rows for 32-bit, 16 for 16-bit, 32 for 8-bit.
    sub = max(8, 32 // itemsize)

    # ---- choose a lane-dense 2-D layout ------------------------------------
    # Prefer a lane width (multiple of 128, <= _MAX_LANES) that divides `total`
    # exactly: then the 2-D slab is a free reshape of x (no pad / slice copies).
    lanes = 0
    if total % _LANE == 0:
        k = total // _LANE
        for m in range(min(k, _MAX_LANES // _LANE), 0, -1):
            if k % m == 0:
                lanes = m * _LANE
                break

    if lanes:
        rows = total // lanes
        x2d = x.reshape(rows, lanes)
        padded = False
    else:
        # Ragged total: minimal flat padding to a whole number of lane-dense rows.
        lanes = min(_MAX_LANES, _round_up(total, _LANE))
        rows = pl.cdiv(total, lanes)
        pad = rows * lanes - total
        x2d = jnp.pad(x.reshape(total), (0, pad)).reshape(rows, lanes)
        padded = True

    # ---- row tiling: ~2 MiB per tile, rows-per-tile a multiple of `sub` -----
    budget_rows = max(sub, (_TARGET_TILE_BYTES // (lanes * itemsize)) // sub * sub)
    tile_rows = rows if rows <= budget_rows else budget_rows
    n_tiles = pl.cdiv(rows, tile_rows)

    out2d = pl.pallas_call(
        _chomp1d_copy_kernel,
        out_shape=jax.ShapeDtypeStruct((rows, lanes), x.dtype),
        grid_spec=pltpu.PrefetchScalarGridSpec(
            num_scalar_prefetch=0,
            grid=(n_tiles,),
            in_specs=[pl.BlockSpec((tile_rows, lanes), lambda i: (i, 0))],
            out_specs=pl.BlockSpec((tile_rows, lanes), lambda i: (i, 0)),
        ),
        compiler_params=pltpu.CompilerParams(
            dimension_semantics=("parallel",),
            vmem_limit_bytes=_VMEM_LIMIT_BYTES,
        ),
    )(x2d)

    out_flat = out2d.reshape(rows * lanes)
    if padded:
        out_flat = out_flat[:total]
    return out_flat.reshape(orig_shape)


if __name__ == "__main__":
    key = jax.random.PRNGKey(0)

    # Shapes consistent with a TCN Chomp1d input: (batch, channels, length).
    N, C, L = 2, 4, 16
    x = jax.random.normal(key, (N, C, L), dtype=jnp.float32)

    # Chomp1d(chomp_size=2) — chomp_size is stored but unused in forward().
    y = jax.block_until_ready(chomp1d(x, chomp_size=2))
    assert y.shape == x.shape and y.dtype == x.dtype
    assert bool(jnp.all(y == x))

    # Oddly-sized shape: exercises the pad / lane-dense fallback path.
    x2 = jax.random.normal(jax.random.PRNGKey(0), (3, 5, 300), dtype=jnp.float32)
    y2 = jax.block_until_ready(chomp1d(x2, chomp_size=3))
    assert y2.shape == x2.shape and y2.dtype == x2.dtype
    assert bool(jnp.all(y2 == x2))

    # Larger multiple-of-128 shape: exercises the zero-copy reshape + tiled grid.
    x3 = jax.random.normal(jax.random.PRNGKey(0), (4, 32, 256), dtype=jnp.bfloat16)
    y3 = jax.block_until_ready(chomp1d(x3, chomp_size=4))
    assert y3.shape == x3.shape and y3.dtype == x3.dtype
    assert bool(jnp.all(y3 == x3))

    print("KERNEL_OK")
</pallas_src>

<mosaic_0001>
module attributes {stable_mosaic.version = 11 : i64} {
  func.func @_chomp1d_copy_kernel(%arg0: i32, %arg1: memref<1x128xf32, #tpu.memory_space<vmem>>, %arg2: memref<1x128xf32, #tpu.memory_space<vmem>>) attributes {dimension_semantics = [#tpu.dimension_semantics<parallel>], iteration_bounds = array<i64: 1>, scalar_prefetch = 0 : i64, scratch_operands = 0 : i64, tpu.core_type = #tpu.core_type<tc>, window_params = [{transform_indices = @transform_0, window_bounds = array<i64: 1, 128>}, {transform_indices = @transform_1, window_bounds = array<i64: 1, 128>}]} {
    %c0 = arith.constant 0 : index
    %c0_0 = arith.constant 0 : index
    %0 = vector.load %arg1[%c0, %c0_0] : memref<1x128xf32, #tpu.memory_space<vmem>>, vector<1x128xf32>
    %c0_1 = arith.constant 0 : index
    %c0_2 = arith.constant 0 : index
    %1 = vector.load %arg2[%c0_1, %c0_2] : memref<1x128xf32, #tpu.memory_space<vmem>>, vector<1x128xf32>
    tpu.vector_store %arg2[%c0_1, %c0_2], %0 {strides = array<i32>} : memref<1x128xf32, #tpu.memory_space<vmem>>, vector<1x128xf32>,
    return
  }
  func.func @transform_0(%arg0: i32) -> (i32, i32) {
    %c0_i32 = arith.constant 0 : i32
    %c0_i32_0 = arith.constant 0 : i32
    return %arg0, %c0_i32 : i32, i32
  }
  func.func @transform_1(%arg0: i32) -> (i32, i32) {
    %c0_i32 = arith.constant 0 : i32
    %c0_i32_0 = arith.constant 0 : i32
    return %arg0, %c0_i32 : i32, i32
  }
}

</mosaic_0001>

<llo_original>
// kernel: chomp1d.1
$region0: #{chomp1d.1}
  #allocation0 [shape = 'u32[]', space=smem, size = 0x4, offset = 0x4, fixed_abs, tag = 'smem constant byte address 0x4 - core index']
  #allocation1 [shape = 'u32[144,128]{1,0:T(1,128)}', space=vmem, size = 0x12000, scoped, tag = 'internal scratch']
  %s0 = inlined_call_operand.vmem [shape: f32[1,128], index: 0, kind: input, shape index: {}]
  %s1 = inlined_call_operand.vmem [shape: f32[1,128], index: 1, kind: output, shape index: {}]
  %s2 = sld [smem:[#allocation0]]
  $region14: #{chomp1d.1} parent=0
    _
  %s4 = ssub.s32 1, %s2
  %s5 = scalar_select 0, %s4, %s2
  // Predicated region
  $region2: #{chomp1d.1} parent=0 // pred_check
    _
  $region3: #{chomp1d.1} parent=0 // pred_check_branch
    %7 = sbr.rel (0) target = $region5
  $region4: #{chomp1d.1} parent=0 // pred_region
    _
  $region5: #{chomp1d.1} parent=0 // pred_fallthru
    _
  %v8 = vld [vmem:[%s0] sm:$0x1]
  %9 = vst [vmem:[%s1] sm:$0x1] %v8
  // Predicated region
  $region6: #{chomp1d.1} parent=0 // pred_check
    _
  $region7: #{chomp1d.1} parent=0 // pred_check_branch
    %11 = sbr.rel (0) target = $region9
  $region8: #{chomp1d.1} parent=0 // pred_region
    _
  $region9: #{chomp1d.1} parent=0 // pred_fallthru
    _
  // Predicated region
  $region10: #{chomp1d.1} parent=0 // pred_check
    _
  $region11: #{chomp1d.1} parent=0 // pred_check_branch
    %13 = sbr.rel (0) target = $region13
  $region12: #{chomp1d.1} parent=0 // pred_region
    _
  $region13: #{chomp1d.1} parent=0 // pred_fallthru
    _

</llo_original>
